<compile_context>
chip_gen: v5e
topology: v5e:2x2
jax: 0.10.0
libtpu: 0.0.40
codegen_flags: <defaults>
</compile_context>

<pallas_src>
import functools

import jax
import jax.numpy as jnp
from jax.experimental import pallas as pl
from jax.experimental.pallas import tpu as pltpu


def mha_kernel(x_ref, gamma_ref, beta_ref, wqkv_ref, bqkv_ref, wout_ref,
               bout_ref, o_ref, *, seq_len, heads, dim_head, scale, eps):
    nt, d = x_ref.shape                    # nt = batch_block * seq_len rows per step
    bt = nt // seq_len
    inner = heads * dim_head

    x = x_ref[...].astype(jnp.float32)     # (nt, D)

    # --- LayerNorm (f32, biased variance like nn.LayerNorm) over all rows at once ---
    mu = jnp.mean(x, axis=-1, keepdims=True)
    xc = x - mu
    var = jnp.mean(xc * xc, axis=-1, keepdims=True)
    xn = xc * jax.lax.rsqrt(var + eps)
    xn = xn * gamma_ref[...] + beta_ref[...]

    # --- Fused QKV projection: one wide bf16 MXU matmul over B*S rows, f32 acc ---
    qkv = jnp.dot(xn.astype(jnp.bfloat16), wqkv_ref[...],
                  preferred_element_type=jnp.float32) + bqkv_ref[...]   # (nt, 3*inner)

    # Column layout matches torch's reshape(B,S,3,H,Dh): [3][head][dim_head].
    # Softmax scale folded once into the whole q slab (not per (S,S) score tile).
    q3 = (qkv[:, 0 * inner:1 * inner] * scale).reshape(bt, seq_len, inner)  # f32
    k3 = qkv[:, 1 * inner:2 * inner].reshape(bt, seq_len, inner)
    v3 = qkv[:, 2 * inner:3 * inner].reshape(bt, seq_len, inner)

    # --- Per-head attention (heads is small & static -> unrolled), batched over the
    #     packed batch dim; output projection folded in as an f32 accumulation so
    #     there is no lane-concatenation of per-head fragments. ---
    out_acc = jnp.zeros((nt, d), jnp.float32)
    for h in range(heads):
        lo = h * dim_head
        qh = q3[:, :, lo:lo + dim_head].astype(jnp.bfloat16)    # (bt, S, Dh)
        kh = k3[:, :, lo:lo + dim_head].astype(jnp.bfloat16)
        vh = v3[:, :, lo:lo + dim_head].astype(jnp.bfloat16)

        # Lane-dense (bt, S, S) scores; softmax along the last (lane) axis in f32.
        s = jax.lax.dot_general(qh, kh, (((2,), (2,)), ((0,), (0,))),
                                preferred_element_type=jnp.float32)
        m = jnp.max(s, axis=-1, keepdims=True)
        e = jnp.exp(s - m)
        denom = jnp.sum(e, axis=-1, keepdims=True)
        p = e * pl.reciprocal(denom, approx=True)
        # TODO(synk): training-mode dropout (p=0.1) on attn not implemented (eval path).

        ctx = jax.lax.dot_general(p.astype(jnp.bfloat16), vh,
                                  (((2,), (1,)), ((0,), (0,))),
                                  preferred_element_type=jnp.float32)   # (bt, S, Dh)
        # Row slice of Wout is sublane-aligned (much cheaper than lane-concat of heads).
        out_acc = out_acc + jnp.dot(
            ctx.reshape(nt, dim_head).astype(jnp.bfloat16),
            wout_ref[lo:lo + dim_head, :],
            preferred_element_type=jnp.float32)

    o_ref[...] = (out_acc + bout_ref[...]).astype(o_ref.dtype)


def multi_head_attention(x, gamma, beta, wqkv, bqkv, wout, bout, *,
                         heads, dim_head, eps=1e-5, batch_block=None):
    """x: [B, S, D] -> [B, S, D]. mask=None / cache=None (eval) path of the module.

    batch_block: batches processed per grid step. Default = B (single step: best on
    single-TensorCore v5e/v6e). On v7x set batch_block=B//2 so the length-2 "parallel"
    grid feeds both TensorCores.
    """
    B, S, D = x.shape
    inner = heads * dim_head
    scale = float(dim_head) ** -0.5
    if batch_block is None:
        batch_block = B
    assert B % batch_block == 0, "batch_block must divide B"
    grid = (B // batch_block,)
    nt = batch_block * S

    x2 = x.reshape(B * S, D)          # pack rows -> fills MXU sublanes, lane-dense I/O

    kernel = functools.partial(mha_kernel, seq_len=S, heads=heads,
                               dim_head=dim_head, scale=scale, eps=eps)

    # TODO(synk): for long S, add a KV grid axis with flash-style online softmax and
    # re-derive the VMEM budget (v7x: 64 MiB physical / 32 MiB default scoped).
    out2 = pl.pallas_call(
        kernel,
        out_shape=jax.ShapeDtypeStruct((B * S, D), x.dtype),
        grid_spec=pltpu.PrefetchScalarGridSpec(
            num_scalar_prefetch=0,
            grid=grid,
            in_specs=[
                pl.BlockSpec((nt, D), lambda g: (g, 0)),          # x rows for this step
                pl.BlockSpec((1, D), lambda g: (0, 0)),           # LN gamma
                pl.BlockSpec((1, D), lambda g: (0, 0)),           # LN beta
                pl.BlockSpec((D, 3 * inner), lambda g: (0, 0)),   # Wqkv (bf16, block-constant)
                pl.BlockSpec((1, 3 * inner), lambda g: (0, 0)),   # bqkv
                pl.BlockSpec((inner, D), lambda g: (0, 0)),       # Wout (bf16, block-constant)
                pl.BlockSpec((1, D), lambda g: (0, 0)),           # bout
            ],
            out_specs=pl.BlockSpec((nt, D), lambda g: (g, 0)),    # lane-dense 2-D slab
        ),
        compiler_params=pltpu.CompilerParams(
            dimension_semantics=("parallel",),
        ),
    )(x2, gamma, beta, wqkv, bqkv, wout, bout)
    return out2.reshape(B, S, D)


def mha_ref(x, gamma, beta, wqkv, bqkv, wout, bout, *, heads, dim_head, eps=1e-5):
    """Pure-JAX reference matching the PyTorch forward (mask=None, cache=None, eval)."""
    B, S, D = x.shape
    scale = float(dim_head) ** -0.5
    mu = jnp.mean(x, axis=-1, keepdims=True)
    var = jnp.mean((x - mu) ** 2, axis=-1, keepdims=True)
    xn = (x - mu) / jnp.sqrt(var + eps) * gamma + beta
    qkv = xn @ wqkv + bqkv                                           # (B, S, 3*inner)
    qkv = qkv.reshape(B, S, 3, heads, dim_head)
    qkv = jnp.transpose(qkv, (2, 0, 3, 1, 4))                        # (3, B, H, S, Dh)
    q, k, v = qkv[0], qkv[1], qkv[2]
    scores = jnp.einsum('bhqd,bhkd->bhqk', q, k) * scale
    attn = jax.nn.softmax(scores, axis=-1)
    out = jnp.einsum('bhqk,bhkd->bhqd', attn, v)
    out = jnp.transpose(out, (0, 2, 1, 3)).reshape(B, S, heads * dim_head)
    return out @ wout + bout


if __name__ == "__main__":
    # Module-consistent small shapes: dim=128 keeps the output and the q/k/v column
    # splits naturally lane-dense (128-lane tiles).
    B, S, D = 2, 8, 128
    heads, dim_head = 4, 32
    inner = heads * dim_head

    key = jax.random.PRNGKey(0)
    kx, kg, kb, k1, k2, k3, k4 = jax.random.split(key, 7)

    x = jax.random.normal(kx, (B, S, D), dtype=jnp.float32)

    # nn.LayerNorm(dim) affine params (perturbed so the affine path is exercised).
    gamma = 1.0 + 0.1 * jax.random.normal(kg, (D,), jnp.float32)
    beta = 0.1 * jax.random.normal(kb, (D,), jnp.float32)

    # nn.Linear params stored as [in, out] so y = x @ W + b (transpose of torch's weight).
    wqkv = jax.random.normal(k1, (D, 3 * inner), jnp.float32) * (1.0 / jnp.sqrt(D))
    bqkv = jax.random.normal(k2, (3 * inner,), jnp.float32) * 0.01
    wout = jax.random.normal(k3, (inner, D), jnp.float32) * (1.0 / jnp.sqrt(inner))
    bout = jax.random.normal(k4, (D,), jnp.float32) * 0.01

    # Kernel consumes bf16 matmul weights (half the weight DMA bytes); the reference
    # uses the same bf16-quantized weights in f32 math.
    # TODO(synk): on v7x the weights could be stored as fp8 (native bf16+fp8 MXU).
    wqkv_bf = wqkv.astype(jnp.bfloat16)
    wout_bf = wout.astype(jnp.bfloat16)

    out = multi_head_attention(
        x, gamma.reshape(1, D), beta.reshape(1, D),
        wqkv_bf, bqkv.reshape(1, 3 * inner),
        wout_bf, bout.reshape(1, D),
        heads=heads, dim_head=dim_head)
    jax.block_until_ready(out)

    ref = mha_ref(x, gamma, beta, wqkv_bf.astype(jnp.float32), bqkv,
                  wout_bf.astype(jnp.float32), bout,
                  heads=heads, dim_head=dim_head)

    assert out.shape == (B, S, D)
    err = jnp.max(jnp.abs(out - ref))
    # Loose-ish tolerance: bf16 activation inputs to the MXU + approx reciprocal vs a
    # pure-f32 reference.
    assert jnp.allclose(out, ref, atol=3e-2, rtol=3e-2), f"max abs err = {err}"
    print("KERNEL_OK")
</pallas_src>

<mosaic_0001>
module attributes {stable_mosaic.version = 11 : i64} {
  func.func @mha_kernel(%arg0: i32, %arg1: memref<16x128xf32, #tpu.memory_space<vmem>>, %arg2: memref<1x128xf32, #tpu.memory_space<vmem>>, %arg3: memref<1x128xf32, #tpu.memory_space<vmem>>, %arg4: memref<128x384xbf16, #tpu.memory_space<vmem>>, %arg5: memref<1x384xf32, #tpu.memory_space<vmem>>, %arg6: memref<128x128xbf16, #tpu.memory_space<vmem>>, %arg7: memref<1x128xf32, #tpu.memory_space<vmem>>, %arg8: memref<16x128xf32, #tpu.memory_space<vmem>>) attributes {dimension_semantics = [#tpu.dimension_semantics<parallel>], iteration_bounds = array<i64: 1>, scalar_prefetch = 0 : i64, scratch_operands = 0 : i64, tpu.core_type = #tpu.core_type<tc>, window_params = [{transform_indices = @transform_0, window_bounds = array<i64: 16, 128>}, {pipeline_mode = #tpu.pipeline_mode<synchronous>, transform_indices = @transform_1, window_bounds = array<i64: 1, 128>}, {pipeline_mode = #tpu.pipeline_mode<synchronous>, transform_indices = @transform_2, window_bounds = array<i64: 1, 128>}, {pipeline_mode = #tpu.pipeline_mode<synchronous>, transform_indices = @transform_3, window_bounds = array<i64: 128, 384>}, {pipeline_mode = #tpu.pipeline_mode<synchronous>, transform_indices = @transform_4, window_bounds = array<i64: 1, 384>}, {pipeline_mode = #tpu.pipeline_mode<synchronous>, transform_indices = @transform_5, window_bounds = array<i64: 128, 128>}, {pipeline_mode = #tpu.pipeline_mode<synchronous>, transform_indices = @transform_6, window_bounds = array<i64: 1, 128>}, {transform_indices = @transform_7, window_bounds = array<i64: 16, 128>}]} {
    %c0 = arith.constant 0 : index
    %c0_0 = arith.constant 0 : index
    %0 = vector.load %arg1[%c0, %c0_0] : memref<16x128xf32, #tpu.memory_space<vmem>>, vector<16x128xf32>
    %cst = arith.constant dense<0.000000e+00> : vector<16xf32>
    %1 = vector.multi_reduction <add>, %0, %cst [1] : vector<16x128xf32> to vector<16xf32>
    %2 = vector.shape_cast %1 : vector<16xf32> to vector<16x1xf32>
    %cst_1 = arith.constant 1.280000e+02 : f32
    %3 = vector.broadcast %cst_1 : f32 to vector<16x1xf32>
    %4 = arith.divf %2, %3 : vector<16x1xf32>
    %5 = vector.broadcast %4 : vector<16x1xf32> to vector<16x128xf32>
    %6 = arith.subf %0, %5 : vector<16x128xf32>
    %7 = arith.mulf %6, %6 : vector<16x128xf32>
    %cst_2 = arith.constant dense<0.000000e+00> : vector<16xf32>
    %8 = vector.multi_reduction <add>, %7, %cst_2 [1] : vector<16x128xf32> to vector<16xf32>
    %9 = vector.shape_cast %8 : vector<16xf32> to vector<16x1xf32>
    %cst_3 = arith.constant 1.280000e+02 : f32
    %10 = vector.broadcast %cst_3 : f32 to vector<16x1xf32>
    %11 = arith.divf %9, %10 : vector<16x1xf32>
    %cst_4 = arith.constant 9.99999974E-6 : f32
    %12 = vector.broadcast %cst_4 : f32 to vector<16x1xf32>
    %13 = arith.addf %11, %12 : vector<16x1xf32>
    %14 = math.rsqrt %13 : vector<16x1xf32>
    %15 = vector.broadcast %14 : vector<16x1xf32> to vector<16x128xf32>
    %16 = arith.mulf %6, %15 : vector<16x128xf32>
    %c0_5 = arith.constant 0 : index
    %c0_6 = arith.constant 0 : index
    %17 = vector.load %arg2[%c0_5, %c0_6] : memref<1x128xf32, #tpu.memory_space<vmem>>, vector<1x128xf32>
    %18 = vector.broadcast %17 : vector<1x128xf32> to vector<16x128xf32>
    %19 = arith.mulf %16, %18 : vector<16x128xf32>
    %c0_7 = arith.constant 0 : index
    %c0_8 = arith.constant 0 : index
    %20 = vector.load %arg3[%c0_7, %c0_8] : memref<1x128xf32, #tpu.memory_space<vmem>>, vector<1x128xf32>
    %21 = vector.broadcast %20 : vector<1x128xf32> to vector<16x128xf32>
    %22 = arith.addf %19, %21 : vector<16x128xf32>
    %23 = arith.truncf %22 : vector<16x128xf32> to vector<16x128xbf16>
    %c0_9 = arith.constant 0 : index
    %c0_10 = arith.constant 0 : index
    %24 = vector.load %arg4[%c0_9, %c0_10] : memref<128x384xbf16, #tpu.memory_space<vmem>>, vector<128x384xbf16>
    %cst_11 = arith.constant dense<0.000000e+00> : vector<16x384xf32>
    %25 = tpu.matmul %23, %24, %cst_11 {dimension_numbers = #tpu.dot_dimension_numbers<[1], [0], [0], [1], [0, 0, 1, 1], [], []>} : vector<16x128xbf16>, vector<128x384xbf16>, vector<16x384xf32> -> vector<16x384xf32>
    %c0_12 = arith.constant 0 : index
    %c0_13 = arith.constant 0 : index
    %26 = vector.load %arg5[%c0_12, %c0_13] : memref<1x384xf32, #tpu.memory_space<vmem>>, vector<1x384xf32>
    %27 = vector.broadcast %26 : vector<1x384xf32> to vector<16x384xf32>
    %28 = arith.addf %25, %27 : vector<16x384xf32>
    %29 = vector.extract_strided_slice %28 {offsets = [0, 0], sizes = [16, 128], strides = [1, 1]} : vector<16x384xf32> to vector<16x128xf32>
    %cst_14 = arith.constant 0.176776692 : f32
    %30 = vector.broadcast %cst_14 : f32 to vector<16x128xf32>
    %31 = arith.mulf %29, %30 : vector<16x128xf32>
    %32 = vector.shape_cast %31 : vector<16x128xf32> to vector<2x8x128xf32>
    %33 = vector.extract_strided_slice %28 {offsets = [0, 128], sizes = [16, 128], strides = [1, 1]} : vector<16x384xf32> to vector<16x128xf32>
    %34 = vector.shape_cast %33 : vector<16x128xf32> to vector<2x8x128xf32>
    %35 = vector.extract_strided_slice %28 {offsets = [0, 256], sizes = [16, 128], strides = [1, 1]} : vector<16x384xf32> to vector<16x128xf32>
    %36 = vector.shape_cast %35 : vector<16x128xf32> to vector<2x8x128xf32>
    %cst_15 = arith.constant 0.000000e+00 : f32
    %37 = vector.broadcast %cst_15 : f32 to vector<16x128xf32>
    %38 = vector.extract_strided_slice %32 {offsets = [0, 0, 0], sizes = [2, 8, 32], strides = [1, 1, 1]} : vector<2x8x128xf32> to vector<2x8x32xf32>
    %39 = arith.truncf %38 : vector<2x8x32xf32> to vector<2x8x32xbf16>
    %40 = vector.extract_strided_slice %34 {offsets = [0, 0, 0], sizes = [2, 8, 32], strides = [1, 1, 1]} : vector<2x8x128xf32> to vector<2x8x32xf32>
    %41 = arith.truncf %40 : vector<2x8x32xf32> to vector<2x8x32xbf16>
    %42 = vector.extract_strided_slice %36 {offsets = [0, 0, 0], sizes = [2, 8, 32], strides = [1, 1, 1]} : vector<2x8x128xf32> to vector<2x8x32xf32>
    %43 = arith.truncf %42 : vector<2x8x32xf32> to vector<2x8x32xbf16>
    %cst_16 = arith.constant dense<0.000000e+00> : vector<2x8x8xf32>
    %44 = tpu.matmul %39, %41, %cst_16 {dimension_numbers = #tpu.dot_dimension_numbers<[2], [2], [1], [1], [0, 0, 0, 1, 1, 1], [0], [0]>} : vector<2x8x32xbf16>, vector<2x8x32xbf16>, vector<2x8x8xf32> -> vector<2x8x8xf32>
    %cst_17 = arith.constant dense<0xFF800000> : vector<2x8xf32>
    %45 = vector.multi_reduction <maximumf>, %44, %cst_17 [2] : vector<2x8x8xf32> to vector<2x8xf32>
    %46 = vector.shape_cast %45 : vector<2x8xf32> to vector<2x8x1xf32>
    %47 = vector.broadcast %46 : vector<2x8x1xf32> to vector<2x8x8xf32>
    %48 = arith.subf %44, %47 : vector<2x8x8xf32>
    %49 = math.exp %48 : vector<2x8x8xf32>
    %cst_18 = arith.constant dense<0.000000e+00> : vector<2x8xf32>
    %50 = vector.multi_reduction <add>, %49, %cst_18 [2] : vector<2x8x8xf32> to vector<2x8xf32>
    %51 = vector.shape_cast %50 : vector<2x8xf32> to vector<2x8x1xf32>
    %52 = tpu.reciprocal %51 {approx = true} : vector<2x8x1xf32> -> vector<2x8x1xf32>
    %53 = vector.broadcast %52 : vector<2x8x1xf32> to vector<2x8x8xf32>
    %54 = arith.mulf %49, %53 : vector<2x8x8xf32>
    %55 = arith.truncf %54 : vector<2x8x8xf32> to vector<2x8x8xbf16>
    %cst_19 = arith.constant dense<0.000000e+00> : vector<2x8x32xf32>
    %56 = tpu.matmul %55, %43, %cst_19 {dimension_numbers = #tpu.dot_dimension_numbers<[2], [1], [1], [2], [0, 0, 0, 1, 1, 2], [0], [0]>} : vector<2x8x8xbf16>, vector<2x8x32xbf16>, vector<2x8x32xf32> -> vector<2x8x32xf32>
    %57 = vector.shape_cast %56 : vector<2x8x32xf32> to vector<16x32xf32>
    %58 = arith.truncf %57 : vector<16x32xf32> to vector<16x32xbf16>
    %c0_20 = arith.constant 0 : index
    %c0_21 = arith.constant 0 : index
    %59 = vector.load %arg6[%c0_20, %c0_21] : memref<128x128xbf16, #tpu.memory_space<vmem>>, vector<32x128xbf16>
    %cst_22 = arith.constant dense<0.000000e+00> : vector<16x128xf32>
    %60 = tpu.matmul %58, %59, %cst_22 {dimension_numbers = #tpu.dot_dimension_numbers<[1], [0], [0], [1], [0, 0, 1, 1], [], []>} : vector<16x32xbf16>, vector<32x128xbf16>, vector<16x128xf32> -> vector<16x128xf32>
    %61 = arith.addf %37, %60 : vector<16x128xf32>
    %62 = vector.extract_strided_slice %32 {offsets = [0, 0, 32], sizes = [2, 8, 32], strides = [1, 1, 1]} : vector<2x8x128xf32> to vector<2x8x32xf32>
    %63 = arith.truncf %62 : vector<2x8x32xf32> to vector<2x8x32xbf16>
    %64 = vector.extract_strided_slice %34 {offsets = [0, 0, 32], sizes = [2, 8, 32], strides = [1, 1, 1]} : vector<2x8x128xf32> to vector<2x8x32xf32>
    %65 = arith.truncf %64 : vector<2x8x32xf32> to vector<2x8x32xbf16>
    %66 = vector.extract_strided_slice %36 {offsets = [0, 0, 32], sizes = [2, 8, 32], strides = [1, 1, 1]} : vector<2x8x128xf32> to vector<2x8x32xf32>
    %67 = arith.truncf %66 : vector<2x8x32xf32> to vector<2x8x32xbf16>
    %cst_23 = arith.constant dense<0.000000e+00> : vector<2x8x8xf32>
    %68 = tpu.matmul %63, %65, %cst_23 {dimension_numbers = #tpu.dot_dimension_numbers<[2], [2], [1], [1], [0, 0, 0, 1, 1, 1], [0], [0]>} : vector<2x8x32xbf16>, vector<2x8x32xbf16>, vector<2x8x8xf32> -> vector<2x8x8xf32>
    %cst_24 = arith.constant dense<0xFF800000> : vector<2x8xf32>
    %69 = vector.multi_reduction <maximumf>, %68, %cst_24 [2] : vector<2x8x8xf32> to vector<2x8xf32>
    %70 = vector.shape_cast %69 : vector<2x8xf32> to vector<2x8x1xf32>
    %71 = vector.broadcast %70 : vector<2x8x1xf32> to vector<2x8x8xf32>
    %72 = arith.subf %68, %71 : vector<2x8x8xf32>
    %73 = math.exp %72 : vector<2x8x8xf32>
    %cst_25 = arith.constant dense<0.000000e+00> : vector<2x8xf32>
    %74 = vector.multi_reduction <add>, %73, %cst_25 [2] : vector<2x8x8xf32> to vector<2x8xf32>
    %75 = vector.shape_cast %74 : vector<2x8xf32> to vector<2x8x1xf32>
    %76 = tpu.reciprocal %75 {approx = true} : vector<2x8x1xf32> -> vector<2x8x1xf32>
    %77 = vector.broadcast %76 : vector<2x8x1xf32> to vector<2x8x8xf32>
    %78 = arith.mulf %73, %77 : vector<2x8x8xf32>
    %79 = arith.truncf %78 : vector<2x8x8xf32> to vector<2x8x8xbf16>
    %cst_26 = arith.constant dense<0.000000e+00> : vector<2x8x32xf32>
    %80 = tpu.matmul %79, %67, %cst_26 {dimension_numbers = #tpu.dot_dimension_numbers<[2], [1], [1], [2], [0, 0, 0, 1, 1, 2], [0], [0]>} : vector<2x8x8xbf16>, vector<2x8x32xbf16>, vector<2x8x32xf32> -> vector<2x8x32xf32>
    %81 = vector.shape_cast %80 : vector<2x8x32xf32> to vector<16x32xf32>
    %82 = arith.truncf %81 : vector<16x32xf32> to vector<16x32xbf16>
    %c32 = arith.constant 32 : index
    %c0_27 = arith.constant 0 : index
    %83 = vector.load %arg6[%c32, %c0_27] : memref<128x128xbf16, #tpu.memory_space<vmem>>, vector<32x128xbf16>
    %cst_28 = arith.constant dense<0.000000e+00> : vector<16x128xf32>
    %84 = tpu.matmul %82, %83, %cst_28 {dimension_numbers = #tpu.dot_dimension_numbers<[1], [0], [0], [1], [0, 0, 1, 1], [], []>} : vector<16x32xbf16>, vector<32x128xbf16>, vector<16x128xf32> -> vector<16x128xf32>
    %85 = arith.addf %61, %84 : vector<16x128xf32>
    %86 = vector.extract_strided_slice %32 {offsets = [0, 0, 64], sizes = [2, 8, 32], strides = [1, 1, 1]} : vector<2x8x128xf32> to vector<2x8x32xf32>
    %87 = arith.truncf %86 : vector<2x8x32xf32> to vector<2x8x32xbf16>
    %88 = vector.extract_strided_slice %34 {offsets = [0, 0, 64], sizes = [2, 8, 32], strides = [1, 1, 1]} : vector<2x8x128xf32> to vector<2x8x32xf32>
    %89 = arith.truncf %88 : vector<2x8x32xf32> to vector<2x8x32xbf16>
    %90 = vector.extract_strided_slice %36 {offsets = [0, 0, 64], sizes = [2, 8, 32], strides = [1, 1, 1]} : vector<2x8x128xf32> to vector<2x8x32xf32>
    %91 = arith.truncf %90 : vector<2x8x32xf32> to vector<2x8x32xbf16>
    %cst_29 = arith.constant dense<0.000000e+00> : vector<2x8x8xf32>
    %92 = tpu.matmul %87, %89, %cst_29 {dimension_numbers = #tpu.dot_dimension_numbers<[2], [2], [1], [1], [0, 0, 0, 1, 1, 1], [0], [0]>} : vector<2x8x32xbf16>, vector<2x8x32xbf16>, vector<2x8x8xf32> -> vector<2x8x8xf32>
    %cst_30 = arith.constant dense<0xFF800000> : vector<2x8xf32>
    %93 = vector.multi_reduction <maximumf>, %92, %cst_30 [2] : vector<2x8x8xf32> to vector<2x8xf32>
    %94 = vector.shape_cast %93 : vector<2x8xf32> to vector<2x8x1xf32>
    %95 = vector.broadcast %94 : vector<2x8x1xf32> to vector<2x8x8xf32>
    %96 = arith.subf %92, %95 : vector<2x8x8xf32>
    %97 = math.exp %96 : vector<2x8x8xf32>
    %cst_31 = arith.constant dense<0.000000e+00> : vector<2x8xf32>
    %98 = vector.multi_reduction <add>, %97, %cst_31 [2] : vector<2x8x8xf32> to vector<2x8xf32>
    %99 = vector.shape_cast %98 : vector<2x8xf32> to vector<2x8x1xf32>
    %100 = tpu.reciprocal %99 {approx = true} : vector<2x8x1xf32> -> vector<2x8x1xf32>
    %101 = vector.broadcast %100 : vector<2x8x1xf32> to vector<2x8x8xf32>
    %102 = arith.mulf %97, %101 : vector<2x8x8xf32>
    %103 = arith.truncf %102 : vector<2x8x8xf32> to vector<2x8x8xbf16>
    %cst_32 = arith.constant dense<0.000000e+00> : vector<2x8x32xf32>
    %104 = tpu.matmul %103, %91, %cst_32 {dimension_numbers = #tpu.dot_dimension_numbers<[2], [1], [1], [2], [0, 0, 0, 1, 1, 2], [0], [0]>} : vector<2x8x8xbf16>, vector<2x8x32xbf16>, vector<2x8x32xf32> -> vector<2x8x32xf32>
    %105 = vector.shape_cast %104 : vector<2x8x32xf32> to vector<16x32xf32>
    %106 = arith.truncf %105 : vector<16x32xf32> to vector<16x32xbf16>
    %c64 = arith.constant 64 : index
    %c0_33 = arith.constant 0 : index
    %107 = vector.load %arg6[%c64, %c0_33] : memref<128x128xbf16, #tpu.memory_space<vmem>>, vector<32x128xbf16>
    %cst_34 = arith.constant dense<0.000000e+00> : vector<16x128xf32>
    %108 = tpu.matmul %106, %107, %cst_34 {dimension_numbers = #tpu.dot_dimension_numbers<[1], [0], [0], [1], [0, 0, 1, 1], [], []>} : vector<16x32xbf16>, vector<32x128xbf16>, vector<16x128xf32> -> vector<16x128xf32>
    %109 = arith.addf %85, %108 : vector<16x128xf32>
    %110 = vector.extract_strided_slice %32 {offsets = [0, 0, 96], sizes = [2, 8, 32], strides = [1, 1, 1]} : vector<2x8x128xf32> to vector<2x8x32xf32>
    %111 = arith.truncf %110 : vector<2x8x32xf32> to vector<2x8x32xbf16>
    %112 = vector.extract_strided_slice %34 {offsets = [0, 0, 96], sizes = [2, 8, 32], strides = [1, 1, 1]} : vector<2x8x128xf32> to vector<2x8x32xf32>
    %113 = arith.truncf %112 : vector<2x8x32xf32> to vector<2x8x32xbf16>
    %114 = vector.extract_strided_slice %36 {offsets = [0, 0, 96], sizes = [2, 8, 32], strides = [1, 1, 1]} : vector<2x8x128xf32> to vector<2x8x32xf32>
    %115 = arith.truncf %114 : vector<2x8x32xf32> to vector<2x8x32xbf16>
    %cst_35 = arith.constant dense<0.000000e+00> : vector<2x8x8xf32>
    %116 = tpu.matmul %111, %113, %cst_35 {dimension_numbers = #tpu.dot_dimension_numbers<[2], [2], [1], [1], [0, 0, 0, 1, 1, 1], [0], [0]>} : vector<2x8x32xbf16>, vector<2x8x32xbf16>, vector<2x8x8xf32> -> vector<2x8x8xf32>
    %cst_36 = arith.constant dense<0xFF800000> : vector<2x8xf32>
    %117 = vector.multi_reduction <maximumf>, %116, %cst_36 [2] : vector<2x8x8xf32> to vector<2x8xf32>
    %118 = vector.shape_cast %117 : vector<2x8xf32> to vector<2x8x1xf32>
    %119 = vector.broadcast %118 : vector<2x8x1xf32> to vector<2x8x8xf32>
    %120 = arith.subf %116, %119 : vector<2x8x8xf32>
    %121 = math.exp %120 : vector<2x8x8xf32>
    %cst_37 = arith.constant dense<0.000000e+00> : vector<2x8xf32>
    %122 = vector.multi_reduction <add>, %121, %cst_37 [2] : vector<2x8x8xf32> to vector<2x8xf32>
    %123 = vector.shape_cast %122 : vector<2x8xf32> to vector<2x8x1xf32>
    %124 = tpu.reciprocal %123 {approx = true} : vector<2x8x1xf32> -> vector<2x8x1xf32>
    %125 = vector.broadcast %124 : vector<2x8x1xf32> to vector<2x8x8xf32>
    %126 = arith.mulf %121, %125 : vector<2x8x8xf32>
    %127 = arith.truncf %126 : vector<2x8x8xf32> to vector<2x8x8xbf16>
    %cst_38 = arith.constant dense<0.000000e+00> : vector<2x8x32xf32>
    %128 = tpu.matmul %127, %115, %cst_38 {dimension_numbers = #tpu.dot_dimension_numbers<[2], [1], [1], [2], [0, 0, 0, 1, 1, 2], [0], [0]>} : vector<2x8x8xbf16>, vector<2x8x32xbf16>, vector<2x8x32xf32> -> vector<2x8x32xf32>
    %129 = vector.shape_cast %128 : vector<2x8x32xf32> to vector<16x32xf32>
    %130 = arith.truncf %129 : vector<16x32xf32> to vector<16x32xbf16>
    %c96 = arith.constant 96 : index
    %c0_39 = arith.constant 0 : index
    %131 = vector.load %arg6[%c96, %c0_39] : memref<128x128xbf16, #tpu.memory_space<vmem>>, vector<32x128xbf16>
    %cst_40 = arith.constant dense<0.000000e+00> : vector<16x128xf32>
    %132 = tpu.matmul %130, %131, %cst_40 {dimension_numbers = #tpu.dot_dimension_numbers<[1], [0], [0], [1], [0, 0, 1, 1], [], []>} : vector<16x32xbf16>, vector<32x128xbf16>, vector<16x128xf32> -> vector<16x128xf32>
    %133 = arith.addf %109, %132 : vector<16x128xf32>
    %c0_41 = arith.constant 0 : index
    %c0_42 = arith.constant 0 : index
    %134 = vector.load %arg7[%c0_41, %c0_42] : memref<1x128xf32, #tpu.memory_space<vmem>>, vector<1x128xf32>
    %135 = vector.broadcast %134 : vector<1x128xf32> to vector<16x128xf32>
    %136 = arith.addf %133, %135 : vector<16x128xf32>
    %c0_43 = arith.constant 0 : index
    %c0_44 = arith.constant 0 : index
    %137 = vector.load %arg8[%c0_43, %c0_44] : memref<16x128xf32, #tpu.memory_space<vmem>>, vector<16x128xf32>
    tpu.vector_store %arg8[%c0_43, %c0_44], %136 {strides = array<i32>} : memref<16x128xf32, #tpu.memory_space<vmem>>, vector<16x128xf32>,
    return
  }
  func.func @transform_0(%arg0: i32) -> (i32, i32) {
    %c0_i32 = arith.constant 0 : i32
    %c0_i32_0 = arith.constant 0 : i32
    return %arg0, %c0_i32 : i32, i32
  }
  func.func @transform_1(%arg0: i32) -> (i32, i32) {
    %c0_i32 = arith.constant 0 : i32
    %c0_i32_0 = arith.constant 0 : i32
    %c0_i32_1 = arith.constant 0 : i32
    return %c0_i32, %c0_i32_0 : i32, i32
  }
  func.func @transform_2(%arg0: i32) -> (i32, i32) {
    %c0_i32 = arith.constant 0 : i32
    %c0_i32_0 = arith.constant 0 : i32
    %c0_i32_1 = arith.constant 0 : i32
    return %c0_i32, %c0_i32_0 : i32, i32
  }
  func.func @transform_3(%arg0: i32) -> (i32, i32) {
    %c0_i32 = arith.constant 0 : i32
    %c0_i32_0 = arith.constant 0 : i32
    %c0_i32_1 = arith.constant 0 : i32
    return %c0_i32, %c0_i32_0 : i32, i32
  }
  func.func @transform_4(%arg0: i32) -> (i32, i32) {
    %c0_i32 = arith.constant 0 : i32
    %c0_i32_0 = arith.constant 0 : i32
    %c0_i32_1 = arith.constant 0 : i32
    return %c0_i32, %c0_i32_0 : i32, i32
  }
  func.func @transform_5(%arg0: i32) -> (i32, i32) {
    %c0_i32 = arith.constant 0 : i32
    %c0_i32_0 = arith.constant 0 : i32
    %c0_i32_1 = arith.constant 0 : i32
    return %c0_i32, %c0_i32_0 : i32, i32
  }
  func.func @transform_6(%arg0: i32) -> (i32, i32) {
    %c0_i32 = arith.constant 0 : i32
    %c0_i32_0 = arith.constant 0 : i32
    %c0_i32_1 = arith.constant 0 : i32
    return %c0_i32, %c0_i32_0 : i32, i32
  }
  func.func @transform_7(%arg0: i32) -> (i32, i32) {
    %c0_i32 = arith.constant 0 : i32
    %c0_i32_0 = arith.constant 0 : i32
    return %arg0, %c0_i32 : i32, i32
  }
}

</mosaic_0001>

<llo_original>
// kernel: tpu_custom_call.1
$region0: #{tpu_custom_call.1}
  #allocation0 [shape = 'u32[]', space=smem, size = 0x4, offset = 0x4, fixed_abs, tag = 'smem constant byte address 0x4 - core index']
  #allocation1 [shape = 'u32[72,128]{1,0:T(1,128)}', space=vmem, size = 0x9000, scoped, tag = 'internal scratch']
  %s0 = inlined_call_operand.hbm [shape: f32[16,128], index: 0, kind: input, shape index: {}]
  %s1 = inlined_call_operand.hbm [shape: f32[1,128], index: 1, kind: input, shape index: {}]
  %s2 = inlined_call_operand.hbm [shape: f32[1,128], index: 2, kind: input, shape index: {}]
  %s3 = inlined_call_operand.hbm [shape: bf16[128,384], index: 3, kind: input, shape index: {}]
  %s4 = inlined_call_operand.vmem [shape: f32[1,384], index: 4, kind: input, shape index: {}]
  %s5 = inlined_call_operand.hbm [shape: bf16[128,128], index: 5, kind: input, shape index: {}]
  %s6 = inlined_call_operand.vmem [shape: f32[1,128], index: 6, kind: input, shape index: {}]
  %s7 = inlined_call_operand.hbm [shape: f32[16,128], index: 7, kind: output, shape index: {}]
  %s8 = sld [smem:[#allocation0]]
  $region58: #{tpu_custom_call.1} parent=0
    _
  %s10 = ssub.s32 1, %s8
  %s11 = scalar_select 0, %s10, %s8
  $region1: #{tpu_custom_call.1} parent=0
    #allocation2 [shape = 'u8[8192]{0}', space=vmem, size = 0x2000, scoped, tag = 'input window, operand 0, single buffered']
    #allocation3 [shape = 's32[1]{0}', space=sflag, size = 0x4, scoped, tag = 'scoped memory for tpu_custom_call.1']
    #allocation4 [shape = 's32[1]{0}', space=sflag, size = 0x4, scoped, tag = 'scoped memory for tpu_custom_call.1']
    #allocation5 [shape = 'u8[512]{0}', space=vmem, size = 0x400, scoped, tag = 'input window, operand 1, single buffered']
    #allocation6 [shape = 's32[1]{0}', space=sflag, size = 0x4, scoped, tag = 'scoped memory for tpu_custom_call.1']
    #allocation7 [shape = 'u8[512]{0}', space=vmem, size = 0x400, scoped, tag = 'input window, operand 2, single buffered']
    #allocation8 [shape = 'u8[98304]{0}', space=vmem, size = 0x18000, scoped, tag = 'input window, operand 3, single buffered']
    #allocation9 [shape = 's32[1]{0}', space=sflag, size = 0x4, scoped, tag = 'scoped memory for tpu_custom_call.1']
    #allocation10 [shape = 'u8[32768]{0}', space=vmem, size = 0x8000, scoped, tag = 'input window, operand 5, single buffered']
    #allocation11 [shape = 'u8[8192]{0}', space=vmem, size = 0x2000, scoped, tag = 'output window, operand 0, single buffered']
    %12 = vsyncpa [#allocation3], 0
    %13 = vsyncpa [#allocation6], 0
    %14 = vsyncpa [#allocation9], 0
    %15 = vsyncpa [#allocation4], 0
    // Predicated region
    $region2: #{tpu_custom_call.1} parent=1 // pred_check
      _
    $region3: #{tpu_custom_call.1} parent=1 // pred_check_branch
      %17 = sbr.rel (0) target = $region5
    $region4: #{tpu_custom_call.1} parent=1 // pred_region
      %19 = vsyncadd [#allocation3], 0
      %s20 = sshll.u32 %s0, 4
      %s21 = int_to_ptr.hbm [resolvable:$true] %s20
      %s22 = sshll.u32 [#allocation2], 4
      %s23 = int_to_ptr.vmem [resolvable:$true] %s22
      %28 = dma.hbm_to_vmem [thread:$0]  %s21, 256, %s23, [#allocation3], 128, 128, 8
    $region5: #{tpu_custom_call.1} parent=1 // pred_fallthru
      _
    // Predicated region
    $region6: #{tpu_custom_call.1} parent=1 // pred_check
      _
    $region7: #{tpu_custom_call.1} parent=1 // pred_check_branch
      %30 = sbr.rel (0) target = $region9
    $region8: #{tpu_custom_call.1} parent=1 // pred_region
      %32 = vsyncadd [#allocation6], 0
      %s34 = sshll.u32 %s1, 4
      %s35 = int_to_ptr.hbm [resolvable:$true] %s34
      %s36 = sshll.u32 [#allocation5], 4
      %s37 = int_to_ptr.vmem [resolvable:$true] %s36
      %39 = dma.hbm_to_vmem [thread:$0]  %s35, 16, %s37, [#allocation6]
    $region9: #{tpu_custom_call.1} parent=1 // pred_fallthru
      _
    // Predicated region
    $region10: #{tpu_custom_call.1} parent=1 // pred_check
      _
    $region11: #{tpu_custom_call.1} parent=1 // pred_check_branch
      %41 = sbr.rel (0) target = $region13
    $region12: #{tpu_custom_call.1} parent=1 // pred_region
      %43 = vsyncadd [#allocation6], 0
      %s45 = sshll.u32 %s2, 4
      %s46 = int_to_ptr.hbm [resolvable:$true] %s45
      %s47 = sshll.u32 [#allocation7], 4
      %s48 = int_to_ptr.vmem [resolvable:$true] %s47
      %50 = dma.hbm_to_vmem [thread:$0]  %s46, 16, %s48, [#allocation6]
    $region13: #{tpu_custom_call.1} parent=1 // pred_fallthru
      _
    // Predicated region
    $region14: #{tpu_custom_call.1} parent=1 // pred_check
      _
    $region15: #{tpu_custom_call.1} parent=1 // pred_check_branch
      %52 = sbr.rel (0) target = $region17
    $region16: #{tpu_custom_call.1} parent=1 // pred_region
      %54 = vsyncadd [#allocation9], 0
      %s55 = sshll.u32 %s3, 4
      %s56 = int_to_ptr.hbm [resolvable:$true] %s55
      %s57 = sshll.u32 [#allocation8], 4
      %s58 = int_to_ptr.vmem [resolvable:$true] %s57
      %63 = dma.hbm_to_vmem [thread:$0]  %s56, 3072, %s58, [#allocation9], 192, 192, 12
    $region17: #{tpu_custom_call.1} parent=1 // pred_fallthru
      _
    // Predicated region
    $region18: #{tpu_custom_call.1} parent=1 // pred_check
      _
    $region19: #{tpu_custom_call.1} parent=1 // pred_check_branch
      %65 = sbr.rel (0) target = $region21
    $region20: #{tpu_custom_call.1} parent=1 // pred_region
      _
    $region21: #{tpu_custom_call.1} parent=1 // pred_fallthru
      _
    // Predicated region
    $region22: #{tpu_custom_call.1} parent=1 // pred_check
      _
    $region23: #{tpu_custom_call.1} parent=1 // pred_check_branch
      %67 = sbr.rel (0) target = $region25
    $region24: #{tpu_custom_call.1} parent=1 // pred_region
      %69 = vsyncadd [#allocation9], 0
      %s70 = sshll.u32 %s5, 4
      %s71 = int_to_ptr.hbm [resolvable:$true] %s70
      %s72 = sshll.u32 [#allocation10], 4
      %s73 = int_to_ptr.vmem [resolvable:$true] %s72
      %78 = dma.hbm_to_vmem [thread:$0]  %s71, 1024, %s73, [#allocation9], 64, 64, 4
    $region25: #{tpu_custom_call.1} parent=1 // pred_fallthru
      _
    // Predicated region
    $region26: #{tpu_custom_call.1} parent=1 // pred_check
      _
    $region27: #{tpu_custom_call.1} parent=1 // pred_check_branch
      %80 = sbr.rel (0) target = $region29
    $region28: #{tpu_custom_call.1} parent=1 // pred_region
      _
    $region29: #{tpu_custom_call.1} parent=1 // pred_fallthru
      _
    // Predicated region
    $region30: #{tpu_custom_call.1} parent=1 // pred_check
      _
    $region31: #{tpu_custom_call.1} parent=1 // pred_check_branch
      %82 = sbr.rel (0) target = $region33
    $region32: #{tpu_custom_call.1} parent=1 // pred_region
      %84 = dma.done [#allocation3], 256
    $region33: #{tpu_custom_call.1} parent=1 // pred_fallthru
      _
    // Predicated region
    $region34: #{tpu_custom_call.1} parent=1 // pred_check
      _
    $region35: #{tpu_custom_call.1} parent=1 // pred_check_branch
      %86 = sbr.rel (0) target = $region37
    $region36: #{tpu_custom_call.1} parent=1 // pred_region
      %88 = dma.done [#allocation6], 16
    $region37: #{tpu_custom_call.1} parent=1 // pred_fallthru
      _
    // Predicated region
    $region38: #{tpu_custom_call.1} parent=1 // pred_check
      _
    $region39: #{tpu_custom_call.1} parent=1 // pred_check_branch
      %90 = sbr.rel (0) target = $region41
    $region40: #{tpu_custom_call.1} parent=1 // pred_region
      %92 = dma.done [#allocation6], 16
    $region41: #{tpu_custom_call.1} parent=1 // pred_fallthru
      _
    // Predicated region
    $region42: #{tpu_custom_call.1} parent=1 // pred_check
      _
    $region43: #{tpu_custom_call.1} parent=1 // pred_check_branch
      %94 = sbr.rel (0) target = $region45
    $region44: #{tpu_custom_call.1} parent=1 // pred_region
      %96 = dma.done [#allocation9], 3072
    $region45: #{tpu_custom_call.1} parent=1 // pred_fallthru
      _
    // Predicated region
    $region46: #{tpu_custom_call.1} parent=1 // pred_check
      _
    $region47: #{tpu_custom_call.1} parent=1 // pred_check_branch
      %98 = sbr.rel (0) target = $region49
    $region48: #{tpu_custom_call.1} parent=1 // pred_region
      %100 = dma.done [#allocation9], 1024
    $region49: #{tpu_custom_call.1} parent=1 // pred_fallthru
      _
    %v102 = vld [vmem:[#allocation2] sm:$0xff]
    %v103 = vld [vmem:[#allocation2 + $0x8] sm:$0xff]
    %104 = vadd.xlane.f32.xlu0 %v102
    %v105 = vpop.xlane.xlu0 %104
    %106 = vadd.xlane.f32.xlu0 %v103
    %v107 = vpop.xlane.xlu0 %106
    %v108 = vrcp.pop 128.0
    %v109 = vmul.f32 128.0, %v108
    %v110 = vsub.f32 1.0, %v109
    %v111 = vmul.f32 %v108, %v110
    %v112 = vadd.f32 %v108, %v111
    %vm113 = vweird.f32 %v108
    %v114 = vsel %vm113, %v108, %v112
    %v115 = vmul.f32 %v105, %v114
    %v116 = vmul.f32 %v107, %v114
    %v117 = vsub.f32 %v102, %v115
    %v118 = vsub.f32 %v103, %v116
    %v119 = vmul.f32 %v117, %v117
    %v120 = vmul.f32 %v118, %v118
    %121 = vadd.xlane.f32.xlu0 %v119
    %v122 = vpop.xlane.xlu0 %121
    %123 = vadd.xlane.f32.xlu0 %v120
    %v124 = vpop.xlane.xlu0 %123
    %v125 = vmul.f32 %v122, %v114
    %v126 = vmul.f32 %v124, %v114
    %v127 = vadd.f32 %v125, 1e-05
    %v128 = vadd.f32 %v126, 1e-05
    %v129 = vrsqrt.pop %v127
    %v130 = vmul.f32 %v129, %v127
    %v131 = vmul.f32 %v130, %v129
    %v132 = vmul.f32 0.5, %v131
    %v133 = vsub.f32 1.5, %v132
    %v134 = vmul.f32 %v129, %v133
    %vm135 = vweird.f32 %v127
    %vm136 = vweird.f32 %v129
    %vm137 = vmor %vm135, %vm136
    %v138 = vsel %vm137, %v129, %v134
    %v139 = vrsqrt.pop %v128
    %v140 = vmul.f32 %v139, %v128
    %v141 = vmul.f32 %v140, %v139
    %v142 = vmul.f32 0.5, %v141
    %v143 = vsub.f32 1.5, %v142
    %v144 = vmul.f32 %v139, %v143
    %vm145 = vweird.f32 %v128
    %vm146 = vweird.f32 %v139
    %vm147 = vmor %vm145, %vm146
    %v148 = vsel %vm147, %v139, %v144
    %v149 = vmul.f32 %v117, %v138
    %v150 = vmul.f32 %v118, %v148
    %v151 = vld [vmem:[#allocation5] sm:$0x1]
    %v153 = vperm.slane %v151, 0
    %v155 = vmul.f32 %v149, %v153
    %v156 = vmul.f32 %v150, %v153
    %v157 = vld [vmem:[#allocation7] sm:$0x1]
    %v159 = vperm.slane %v157, 0
    %v161 = vadd.f32 %v155, %v159
    %v162 = vadd.f32 %v156, %v159
    %v163 = vpack.c.bf16 %v162, %v161
    %v164 = vld [vmem:[#allocation8] sm:$0xff]
    %v165 = vld [vmem:[#allocation8 + $0x8] sm:$0xf]
    %v166 = vld [vmem:[#allocation8 + $0xc] sm:$0xff]
    %v167 = vld [vmem:[#allocation8 + $0x14] sm:$0xf]
    %v168 = vld [vmem:[#allocation8 + $0x18] sm:$0xff]
    %v169 = vld [vmem:[#allocation8 + $0x20] sm:$0xf]
    %v170 = vld [vmem:[#allocation8 + $0x24] sm:$0xff]
    %v171 = vld [vmem:[#allocation8 + $0x2c] sm:$0xf]
    %v172 = vld [vmem:[#allocation8 + $0x30] sm:$0xff]
    %v173 = vld [vmem:[#allocation8 + $0x38] sm:$0xf]
    %v174 = vld [vmem:[#allocation8 + $0x3c] sm:$0xff]
    %v175 = vld [vmem:[#allocation8 + $0x44] sm:$0xf]
    %v176 = vld [vmem:[#allocation8 + $0x48] sm:$0xff]
    %v177 = vld [vmem:[#allocation8 + $0x50] sm:$0xf]
    %v178 = vld [vmem:[#allocation8 + $0x54] sm:$0xff]
    %v179 = vld [vmem:[#allocation8 + $0x5c] sm:$0xf]
    %v180 = vld [vmem:[#allocation8 + $0x60] sm:$0xff]
    %v181 = vld [vmem:[#allocation8 + $0x68] sm:$0xf]
    %v182 = vld [vmem:[#allocation8 + $0x6c] sm:$0xff]
    %v183 = vld [vmem:[#allocation8 + $0x74] sm:$0xf]
    %v184 = vld [vmem:[#allocation8 + $0x78] sm:$0xff]
    %v185 = vld [vmem:[#allocation8 + $0x80] sm:$0xf]
    %v186 = vld [vmem:[#allocation8 + $0x84] sm:$0xff]
    %v187 = vld [vmem:[#allocation8 + $0x8c] sm:$0xf]
    %v188 = vld [vmem:[#allocation8 + $0x90] sm:$0xff]
    %v189 = vld [vmem:[#allocation8 + $0x98] sm:$0xf]
    %v190 = vld [vmem:[#allocation8 + $0x9c] sm:$0xff]
    %v191 = vld [vmem:[#allocation8 + $0xa4] sm:$0xf]
    %v192 = vld [vmem:[#allocation8 + $0xa8] sm:$0xff]
    %v193 = vld [vmem:[#allocation8 + $0xb0] sm:$0xf]
    %v194 = vld [vmem:[#allocation8 + $0xb4] sm:$0xff]
    %v195 = vld [vmem:[#allocation8 + $0xbc] sm:$0xf]
    %v196 = vld [vmem:[%s4] sm:$0x7]
    %v198 = vperm.slane %v196, 0
    %v199 = vperm.slane %v196, 1
    %v200 = vperm.slane %v196, 2
    %v236 = vunpack.c.l.b16 %v164
    %v237 = vunpack.c.h.b16 %v164
    %v238 = vunpack.c.l.b16 %v165
    %v239 = vunpack.c.l.b16 %v166
    %v240 = vunpack.c.h.b16 %v166
    %v241 = vunpack.c.l.b16 %v167
    %v242 = vunpack.c.l.b16 %v168
    %v243 = vunpack.c.h.b16 %v168
    %v244 = vunpack.c.l.b16 %v169
    %v245 = vunpack.c.l.b16 %v170
    %v246 = vunpack.c.h.b16 %v170
    %v247 = vunpack.c.l.b16 %v171
    %v248 = vunpack.c.l.b16 %v172
    %v249 = vunpack.c.h.b16 %v172
    %v250 = vunpack.c.l.b16 %v173
    %v251 = vunpack.c.l.b16 %v174
    %v252 = vunpack.c.h.b16 %v174
    %v253 = vunpack.c.l.b16 %v175
    %v254 = vunpack.c.l.b16 %v176
    %v255 = vunpack.c.h.b16 %v176
    %v256 = vunpack.c.l.b16 %v177
    %v257 = vunpack.c.l.b16 %v178
    %v258 = vunpack.c.h.b16 %v178
    %v259 = vunpack.c.l.b16 %v179
    %v260 = vunpack.c.l.b16 %v180
    %v261 = vunpack.c.h.b16 %v180
    %v262 = vunpack.c.l.b16 %v181
    %v263 = vunpack.c.l.b16 %v182
    %v264 = vunpack.c.h.b16 %v182
    %v265 = vunpack.c.l.b16 %v183
    %v266 = vunpack.c.l.b16 %v184
    %v267 = vunpack.c.h.b16 %v184
    %v268 = vunpack.c.l.b16 %v185
    %v269 = vunpack.c.l.b16 %v186
    %v270 = vunpack.c.h.b16 %v186
    %v271 = vunpack.c.l.b16 %v187
    %v272 = vunpack.c.l.b16 %v188
    %v273 = vunpack.c.h.b16 %v188
    %v274 = vunpack.c.l.b16 %v189
    %v275 = vunpack.c.l.b16 %v190
    %v276 = vunpack.c.h.b16 %v190
    %v277 = vunpack.c.l.b16 %v191
    %v278 = vunpack.c.l.b16 %v192
    %v279 = vunpack.c.h.b16 %v192
    %v280 = vunpack.c.l.b16 %v193
    %v281 = vunpack.c.l.b16 %v194
    %v282 = vunpack.c.h.b16 %v194
    %v283 = vunpack.c.l.b16 %v195
    %v284 = vpack.c.b16 %v239, %v236
    %v285 = vpack.c.b16 %v240, %v237
    %v286 = vpack.c.b16 %v241, %v238
    %v287 = vpack.c.b16 %v245, %v242
    %v288 = vpack.c.b16 %v246, %v243
    %v289 = vpack.c.b16 %v247, %v244
    %v290 = vpack.c.b16 %v251, %v248
    %v291 = vpack.c.b16 %v252, %v249
    %v292 = vpack.c.b16 %v253, %v250
    %v293 = vpack.c.b16 %v257, %v254
    %v294 = vpack.c.b16 %v258, %v255
    %v295 = vpack.c.b16 %v259, %v256
    %v296 = vpack.c.b16 %v263, %v260
    %v297 = vpack.c.b16 %v264, %v261
    %v298 = vpack.c.b16 %v265, %v262
    %v299 = vpack.c.b16 %v269, %v266
    %v300 = vpack.c.b16 %v270, %v267
    %v301 = vpack.c.b16 %v271, %v268
    %v302 = vpack.c.b16 %v275, %v272
    %v303 = vpack.c.b16 %v276, %v273
    %v304 = vpack.c.b16 %v277, %v274
    %v305 = vpack.c.b16 %v281, %v278
    %v306 = vpack.c.b16 %v282, %v279
    %v307 = vpack.c.b16 %v283, %v280
    %332 = vmatpush.bf16.msra.mxu0 %v305
    %333 = vmatpush.bf16.msra.mxu0 %v302
    %334 = vmatpush.bf16.msra.mxu0 %v299
    %335 = vmatpush.bf16.msra.mxu0 %v296
    %336 = vmatpush.bf16.msra.mxu0 %v293
    %337 = vmatpush.bf16.msra.mxu0 %v290
    %338 = vmatpush.bf16.msra.mxu0 %v287
    %339 = vmatpush.bf16.msra.mxu0 %v284
    %340 = vmatmul.bf16.gmra.mxu0 %v163
    %v341 = vpop.f32.mrf.mxu0
    %v342 = vadd.f32 %v198, %v341
    %v343 = vpop.f32.mrf.mxu0
    %v344 = vadd.f32 %v198, %v343
    %345 = vdwg.mxu0
    %346 = vmatpush.bf16.msra.mxu0 %v306
    %347 = vmatpush.bf16.msra.mxu0 %v303
    %348 = vmatpush.bf16.msra.mxu0 %v300
    %349 = vmatpush.bf16.msra.mxu0 %v297
    %350 = vmatpush.bf16.msra.mxu0 %v294
    %351 = vmatpush.bf16.msra.mxu0 %v291
    %352 = vmatpush.bf16.msra.mxu0 %v288
    %353 = vmatpush.bf16.msra.mxu0 %v285
    %354 = vmatmul.bf16.gmra.mxu0 %v163
    %v355 = vpop.f32.mrf.mxu0
    %v356 = vadd.f32 %v199, %v355
    %v357 = vpop.f32.mrf.mxu0
    %v358 = vadd.f32 %v199, %v357
    %359 = vdwg.mxu0
    %360 = vmatpush.bf16.msra.mxu0 %v307
    %361 = vmatpush.bf16.msra.mxu0 %v304
    %362 = vmatpush.bf16.msra.mxu0 %v301
    %363 = vmatpush.bf16.msra.mxu0 %v298
    %364 = vmatpush.bf16.msra.mxu0 %v295
    %365 = vmatpush.bf16.msra.mxu0 %v292
    %366 = vmatpush.bf16.msra.mxu0 %v289
    %367 = vmatpush.bf16.msra.mxu0 %v286
    %368 = vmatmul.bf16.gmra.mxu0 %v163
    %v369 = vpop.f32.mrf.mxu0
    %v370 = vadd.f32 %v200, %v369
    %v371 = vpop.f32.mrf.mxu0
    %v372 = vadd.f32 %v200, %v371
    %373 = vdwg.mxu0
    %v374 = vmul.f32 %v342, 0.17677669
    %v375 = vmul.f32 %v344, 0.17677669
    %v376 = vpack.c.bf16 %v374, %v374
    %v377 = vpack.c.bf16 %v375, %v375
    %v378 = vpack.c.bf16 %v356, %v356
    %v379 = vpack.c.bf16 %v358, %v358
    %v380 = vpack.c.bf16 %v370, %v370
    %v381 = vpack.c.bf16 %v372, %v372
    %vm382 = vcmask 261120
    %v384 = vsel %vm382, %v376, 0
    %v387 = vsel %vm382, %v378, 0
    %389 = vmatpush.bf16.xpose.msra.mxu0 0
    %390 = vmatpush.bf16.xpose.msra.mxu0 0
    %391 = vmatpush.bf16.xpose.msra.mxu0 0
    %392 = vmatpush.bf16.xpose.msra.mxu0 0
    %393 = vmatpush.bf16.xpose.msra.mxu0 0
    %394 = vmatpush.bf16.xpose.msra.mxu0 0
    %395 = vmatpush.bf16.xpose.msra.mxu0 0
    %396 = vmatpush.bf16.xpose.msra.mxu0 %v387
    %397 = vmatmul.bf16.gmra.mxu0 %v384
    %v398 = vpop.f32.mrf.mxu0
    %v399 = vadd.f32 0.0, %v398
    %v400 = vpop.f32.mrf.mxu0
    %401 = vdwg.mxu0
    %v403 = vsel %vm382, %v377, 0
    %v406 = vsel %vm382, %v379, 0
    %408 = vmatpush.bf16.xpose.msra.mxu0 0
    %409 = vmatpush.bf16.xpose.msra.mxu0 0
    %410 = vmatpush.bf16.xpose.msra.mxu0 0
    %411 = vmatpush.bf16.xpose.msra.mxu0 0
    %412 = vmatpush.bf16.xpose.msra.mxu0 0
    %413 = vmatpush.bf16.xpose.msra.mxu0 0
    %414 = vmatpush.bf16.xpose.msra.mxu0 0
    %415 = vmatpush.bf16.xpose.msra.mxu0 %v406
    %416 = vmatmul.bf16.gmra.mxu0 %v403
    %v417 = vpop.f32.mrf.mxu0
    %v418 = vadd.f32 0.0, %v417
    %v419 = vpop.f32.mrf.mxu0
    %420 = vdwg.mxu0
    %vm421 = vcmask 64512
    %v422 = vsel %vm421, %v399, -inf
    %423 = vmax.xlane.f32.xlu0 %v422
    %v424 = vpop.xlane.xlu0 %423
    %v425 = vsel %vm421, %v418, -inf
    %426 = vmax.xlane.f32.xlu0 %v425
    %v427 = vpop.xlane.xlu0 %426
    %v428 = vsub.f32 %v399, %v424
    %v429 = vsub.f32 %v418, %v427
    %v430 = vmul.f32 %v428, 1.442695
    %v431 = vpow.pop %v430
    %v432 = vmul.f32 %v429, 1.442695
    %v433 = vpow.pop %v432
    %v434 = vsel %vm421, %v431, 0.0
    %435 = vadd.xlane.f32.xlu0 %v434
    %v436 = vpop.xlane.xlu0 %435
    %v437 = vsel %vm421, %v433, 0.0
    %438 = vadd.xlane.f32.xlu0 %v437
    %v439 = vpop.xlane.xlu0 %438
    %v440 = vrcp.pop %v436
    %v441 = vrcp.pop %v439
    %v442 = vmul.f32 %v431, %v440
    %v443 = vmul.f32 %v433, %v441
    %v444 = vpack.c.bf16 %v442, %v442
    %v445 = vpack.c.bf16 %v443, %v443
    %v447 = vsel %vm421, %v444, 0
    %vm449 = vcmask 1043456
    %v451 = vsel %vm449, %v380, 0
    %453 = vmatpush.bf16.msra.mxu0 0
    %454 = vmatpush.bf16.msra.mxu0 0
    %455 = vmatpush.bf16.msra.mxu0 0
    %456 = vmatpush.bf16.msra.mxu0 0
    %457 = vmatpush.bf16.msra.mxu0 0
    %458 = vmatpush.bf16.msra.mxu0 0
    %459 = vmatpush.bf16.msra.mxu0 0
    %460 = vmatpush.bf16.msra.mxu0 %v451
    %461 = vmatmul.bf16.gmra.mxu0 %v447
    %v462 = vpop.f32.mrf.mxu0
    %v463 = vadd.f32 0.0, %v462
    %v464 = vpop.f32.mrf.mxu0
    %465 = vdwg.mxu0
    %v467 = vsel %vm421, %v445, 0
    %v470 = vsel %vm449, %v381, 0
    %472 = vmatpush.bf16.msra.mxu0 0
    %473 = vmatpush.bf16.msra.mxu0 0
    %474 = vmatpush.bf16.msra.mxu0 0
    %475 = vmatpush.bf16.msra.mxu0 0
    %476 = vmatpush.bf16.msra.mxu0 0
    %477 = vmatpush.bf16.msra.mxu0 0
    %478 = vmatpush.bf16.msra.mxu0 0
    %479 = vmatpush.bf16.msra.mxu0 %v470
    %480 = vmatmul.bf16.gmra.mxu0 %v467
    %v481 = vpop.f32.mrf.mxu0
    %v482 = vadd.f32 0.0, %v481
    %v483 = vpop.f32.mrf.mxu0
    %484 = vdwg.mxu0
    %v485 = vpack.c.bf16 %v482, %v463
    %v486 = vld [vmem:[#allocation10] sm:$0xf]
    %v487 = vld [vmem:[#allocation10 + $0x4] sm:$0xf]
    %v488 = vld [vmem:[#allocation10 + $0x8] sm:$0xf]
    %v489 = vld [vmem:[#allocation10 + $0xc] sm:$0xf]
    %v491 = vunpack.c.l.b16 %v376
    %v492 = vpack.c.b16 %v491, %v491
    %493 = vrot.lane.b32.xlu0 %v492, 96
    %v494 = vpop.permute.xlu0 %493
    %v496 = vunpack.c.l.b16 %v378
    %v497 = vpack.c.b16 %v496, %v496
    %498 = vrot.lane.b32.xlu0 %v497, 96
    %v499 = vpop.permute.xlu0 %498
    %v501 = vsel %vm382, %v494, 0
    %v504 = vsel %vm382, %v499, 0
    %506 = vmatpush.bf16.xpose.msra.mxu0 0
    %507 = vmatpush.bf16.xpose.msra.mxu0 0
    %508 = vmatpush.bf16.xpose.msra.mxu0 0
    %509 = vmatpush.bf16.xpose.msra.mxu0 0
    %510 = vmatpush.bf16.xpose.msra.mxu0 0
    %511 = vmatpush.bf16.xpose.msra.mxu0 0
    %512 = vmatpush.bf16.xpose.msra.mxu0 0
    %513 = vmatpush.bf16.xpose.msra.mxu0 %v504
    %514 = vmatmul.bf16.gmra.mxu0 %v501
    %v515 = vpop.f32.mrf.mxu0
    %v516 = vadd.f32 0.0, %v515
    %v517 = vpop.f32.mrf.mxu0
    %518 = vdwg.mxu0
    %v520 = vunpack.c.l.b16 %v377
    %v521 = vpack.c.b16 %v520, %v520
    %522 = vrot.lane.b32.xlu0 %v521, 96
    %v523 = vpop.permute.xlu0 %522
    %v525 = vunpack.c.l.b16 %v379
    %v526 = vpack.c.b16 %v525, %v525
    %527 = vrot.lane.b32.xlu0 %v526, 96
    %v528 = vpop.permute.xlu0 %527
    %v530 = vsel %vm382, %v523, 0
    %v533 = vsel %vm382, %v528, 0
    %535 = vmatpush.bf16.xpose.msra.mxu0 0
    %536 = vmatpush.bf16.xpose.msra.mxu0 0
    %537 = vmatpush.bf16.xpose.msra.mxu0 0
    %538 = vmatpush.bf16.xpose.msra.mxu0 0
    %539 = vmatpush.bf16.xpose.msra.mxu0 0
    %540 = vmatpush.bf16.xpose.msra.mxu0 0
    %541 = vmatpush.bf16.xpose.msra.mxu0 0
    %542 = vmatpush.bf16.xpose.msra.mxu0 %v533
    %543 = vmatmul.bf16.gmra.mxu0 %v530
    %v544 = vpop.f32.mrf.mxu0
    %v545 = vadd.f32 0.0, %v544
    %v546 = vpop.f32.mrf.mxu0
    %547 = vdwg.mxu0
    %v548 = vsel %vm421, %v516, -inf
    %549 = vmax.xlane.f32.xlu0 %v548
    %v550 = vpop.xlane.xlu0 %549
    %v551 = vsel %vm421, %v545, -inf
    %552 = vmax.xlane.f32.xlu0 %v551
    %v553 = vpop.xlane.xlu0 %552
    %v554 = vsub.f32 %v516, %v550
    %v555 = vsub.f32 %v545, %v553
    %v556 = vmul.f32 %v554, 1.442695
    %v557 = vpow.pop %v556
    %v558 = vmul.f32 %v555, 1.442695
    %v559 = vpow.pop %v558
    %v560 = vsel %vm421, %v557, 0.0
    %561 = vadd.xlane.f32.xlu0 %v560
    %v562 = vpop.xlane.xlu0 %561
    %v563 = vsel %vm421, %v559, 0.0
    %564 = vadd.xlane.f32.xlu0 %v563
    %v565 = vpop.xlane.xlu0 %564
    %v566 = vrcp.pop %v562
    %v567 = vrcp.pop %v565
    %v568 = vmul.f32 %v557, %v566
    %v569 = vmul.f32 %v559, %v567
    %v570 = vpack.c.bf16 %v568, %v568
    %v571 = vpack.c.bf16 %v569, %v569
    %v573 = vunpack.c.l.b16 %v380
    %v574 = vpack.c.b16 %v573, %v573
    %575 = vrot.lane.b32.xlu0 %v574, 96
    %v576 = vpop.permute.xlu0 %575
    %v578 = vsel %vm421, %v570, 0
    %v581 = vsel %vm449, %v576, 0
    %583 = vmatpush.bf16.msra.mxu0 0
    %584 = vmatpush.bf16.msra.mxu0 0
    %585 = vmatpush.bf16.msra.mxu0 0
    %586 = vmatpush.bf16.msra.mxu0 0
    %587 = vmatpush.bf16.msra.mxu0 0
    %588 = vmatpush.bf16.msra.mxu0 0
    %589 = vmatpush.bf16.msra.mxu0 0
    %590 = vmatpush.bf16.msra.mxu0 %v581
    %591 = vmatmul.bf16.gmra.mxu0 %v578
    %v592 = vpop.f32.mrf.mxu0
    %v593 = vadd.f32 0.0, %v592
    %v594 = vpop.f32.mrf.mxu0
    %595 = vdwg.mxu0
    %v597 = vunpack.c.l.b16 %v381
    %v598 = vpack.c.b16 %v597, %v597
    %599 = vrot.lane.b32.xlu0 %v598, 96
    %v600 = vpop.permute.xlu0 %599
    %v602 = vsel %vm421, %v571, 0
    %v605 = vsel %vm449, %v600, 0
    %607 = vmatpush.bf16.msra.mxu0 0
    %608 = vmatpush.bf16.msra.mxu0 0
    %609 = vmatpush.bf16.msra.mxu0 0
    %610 = vmatpush.bf16.msra.mxu0 0
    %611 = vmatpush.bf16.msra.mxu0 0
    %612 = vmatpush.bf16.msra.mxu0 0
    %613 = vmatpush.bf16.msra.mxu0 0
    %614 = vmatpush.bf16.msra.mxu0 %v605
    %615 = vmatmul.bf16.gmra.mxu0 %v602
    %v616 = vpop.f32.mrf.mxu0
    %v617 = vadd.f32 0.0, %v616
    %v618 = vpop.f32.mrf.mxu0
    %619 = vdwg.mxu0
    %v620 = vpack.c.bf16 %v617, %v593
    %v621 = vld [vmem:[#allocation10 + $0x10] sm:$0xf]
    %v622 = vld [vmem:[#allocation10 + $0x14] sm:$0xf]
    %v623 = vld [vmem:[#allocation10 + $0x18] sm:$0xf]
    %v624 = vld [vmem:[#allocation10 + $0x1c] sm:$0xf]
    %v629 = vunpack.c.l.b16 %v621
    %v630 = vunpack.c.l.b16 %v622
    %v631 = vunpack.c.l.b16 %v623
    %v632 = vunpack.c.l.b16 %v624
    %v633 = vpack.c.b16 %v630, %v629
    %v634 = vpack.c.b16 %v632, %v631
    %v638 = vsel %vm382, %v620, 0
    %640 = vmatpush.bf16.msra.mxu0 0
    %641 = vmatpush.bf16.msra.mxu0 0
    %642 = vmatpush.bf16.msra.mxu0 0
    %643 = vmatpush.bf16.msra.mxu0 0
    %644 = vmatpush.bf16.msra.mxu0 0
    %645 = vmatpush.bf16.msra.mxu0 0
    %646 = vmatpush.bf16.msra.mxu0 %v634
    %647 = vmatpush.bf16.msra.mxu0 %v633
    %648 = vmatmul.bf16.gmra.mxu0 %v638
    %v649 = vpop.f32.mrf.mxu0
    %v650 = vadd.f32 0.0, %v649
    %v651 = vpop.f32.mrf.mxu0
    %v652 = vadd.f32 0.0, %v651
    %653 = vdwg.mxu0
    %v658 = vunpack.c.l.b16 %v486
    %v659 = vunpack.c.l.b16 %v487
    %v660 = vunpack.c.l.b16 %v488
    %v661 = vunpack.c.l.b16 %v489
    %v662 = vpack.c.b16 %v659, %v658
    %v663 = vpack.c.b16 %v661, %v660
    %v667 = vsel %vm382, %v485, 0
    %669 = vmatpush.bf16.msra.mxu0 0
    %670 = vmatpush.bf16.msra.mxu0 0
    %671 = vmatpush.bf16.msra.mxu0 0
    %672 = vmatpush.bf16.msra.mxu0 0
    %673 = vmatpush.bf16.msra.mxu0 0
    %674 = vmatpush.bf16.msra.mxu0 0
    %675 = vmatpush.bf16.msra.mxu0 %v663
    %676 = vmatpush.bf16.msra.mxu0 %v662
    %677 = vmatmul.bf16.gmra.mxu0 %v667
    %v678 = vpop.f32.mrf.mxu0
    %v679 = vadd.f32 %v650, %v678
    %v680 = vpop.f32.mrf.mxu0
    %v681 = vadd.f32 %v652, %v680
    %682 = vdwg.mxu0
    %683 = vrot.lane.b32.xlu0 %v492, 64
    %v684 = vpop.permute.xlu0 %683
    %685 = vrot.lane.b32.xlu0 %v497, 64
    %v686 = vpop.permute.xlu0 %685
    %v688 = vsel %vm382, %v684, 0
    %v691 = vsel %vm382, %v686, 0
    %693 = vmatpush.bf16.xpose.msra.mxu0 0
    %694 = vmatpush.bf16.xpose.msra.mxu0 0
    %695 = vmatpush.bf16.xpose.msra.mxu0 0
    %696 = vmatpush.bf16.xpose.msra.mxu0 0
    %697 = vmatpush.bf16.xpose.msra.mxu0 0
    %698 = vmatpush.bf16.xpose.msra.mxu0 0
    %699 = vmatpush.bf16.xpose.msra.mxu0 0
    %700 = vmatpush.bf16.xpose.msra.mxu0 %v691
    %701 = vmatmul.bf16.gmra.mxu0 %v688
    %v702 = vpop.f32.mrf.mxu0
    %v703 = vadd.f32 0.0, %v702
    %v704 = vpop.f32.mrf.mxu0
    %705 = vdwg.mxu0
    %706 = vrot.lane.b32.xlu0 %v521, 64
    %v707 = vpop.permute.xlu0 %706
    %708 = vrot.lane.b32.xlu0 %v526, 64
    %v709 = vpop.permute.xlu0 %708
    %v711 = vsel %vm382, %v707, 0
    %v714 = vsel %vm382, %v709, 0
    %716 = vmatpush.bf16.xpose.msra.mxu0 0
    %717 = vmatpush.bf16.xpose.msra.mxu0 0
    %718 = vmatpush.bf16.xpose.msra.mxu0 0
    %719 = vmatpush.bf16.xpose.msra.mxu0 0
    %720 = vmatpush.bf16.xpose.msra.mxu0 0
    %721 = vmatpush.bf16.xpose.msra.mxu0 0
    %722 = vmatpush.bf16.xpose.msra.mxu0 0
    %723 = vmatpush.bf16.xpose.msra.mxu0 %v714
    %724 = vmatmul.bf16.gmra.mxu0 %v711
    %v725 = vpop.f32.mrf.mxu0
    %v726 = vadd.f32 0.0, %v725
    %v727 = vpop.f32.mrf.mxu0
    %728 = vdwg.mxu0
    %v729 = vsel %vm421, %v703, -inf
    %730 = vmax.xlane.f32.xlu0 %v729
    %v731 = vpop.xlane.xlu0 %730
    %v732 = vsel %vm421, %v726, -inf
    %733 = vmax.xlane.f32.xlu0 %v732
    %v734 = vpop.xlane.xlu0 %733
    %v735 = vsub.f32 %v703, %v731
    %v736 = vsub.f32 %v726, %v734
    %v737 = vmul.f32 %v735, 1.442695
    %v738 = vpow.pop %v737
    %v739 = vmul.f32 %v736, 1.442695
    %v740 = vpow.pop %v739
    %v741 = vsel %vm421, %v738, 0.0
    %742 = vadd.xlane.f32.xlu0 %v741
    %v743 = vpop.xlane.xlu0 %742
    %v744 = vsel %vm421, %v740, 0.0
    %745 = vadd.xlane.f32.xlu0 %v744
    %v746 = vpop.xlane.xlu0 %745
    %v747 = vrcp.pop %v743
    %v748 = vrcp.pop %v746
    %v749 = vmul.f32 %v738, %v747
    %v750 = vmul.f32 %v740, %v748
    %v751 = vpack.c.bf16 %v749, %v749
    %v752 = vpack.c.bf16 %v750, %v750
    %753 = vrot.lane.b32.xlu0 %v574, 64
    %v754 = vpop.permute.xlu0 %753
    %v756 = vsel %vm421, %v751, 0
    %v759 = vsel %vm449, %v754, 0
    %761 = vmatpush.bf16.msra.mxu0 0
    %762 = vmatpush.bf16.msra.mxu0 0
    %763 = vmatpush.bf16.msra.mxu0 0
    %764 = vmatpush.bf16.msra.mxu0 0
    %765 = vmatpush.bf16.msra.mxu0 0
    %766 = vmatpush.bf16.msra.mxu0 0
    %767 = vmatpush.bf16.msra.mxu0 0
    %768 = vmatpush.bf16.msra.mxu0 %v759
    %769 = vmatmul.bf16.gmra.mxu0 %v756
    %v770 = vpop.f32.mrf.mxu0
    %v771 = vadd.f32 0.0, %v770
    %v772 = vpop.f32.mrf.mxu0
    %773 = vdwg.mxu0
    %774 = vrot.lane.b32.xlu0 %v598, 64
    %v775 = vpop.permute.xlu0 %774
    %v777 = vsel %vm421, %v752, 0
    %v780 = vsel %vm449, %v775, 0
    %782 = vmatpush.bf16.msra.mxu0 0
    %783 = vmatpush.bf16.msra.mxu0 0
    %784 = vmatpush.bf16.msra.mxu0 0
    %785 = vmatpush.bf16.msra.mxu0 0
    %786 = vmatpush.bf16.msra.mxu0 0
    %787 = vmatpush.bf16.msra.mxu0 0
    %788 = vmatpush.bf16.msra.mxu0 0
    %789 = vmatpush.bf16.msra.mxu0 %v780
    %790 = vmatmul.bf16.gmra.mxu0 %v777
    %v791 = vpop.f32.mrf.mxu0
    %v792 = vadd.f32 0.0, %v791
    %v793 = vpop.f32.mrf.mxu0
    %794 = vdwg.mxu0
    %v795 = vpack.c.bf16 %v792, %v771
    %v796 = vld [vmem:[#allocation10 + $0x20] sm:$0xf]
    %v797 = vld [vmem:[#allocation10 + $0x24] sm:$0xf]
    %v798 = vld [vmem:[#allocation10 + $0x28] sm:$0xf]
    %v799 = vld [vmem:[#allocation10 + $0x2c] sm:$0xf]
    %v804 = vunpack.c.l.b16 %v796
    %v805 = vunpack.c.l.b16 %v797
    %v806 = vunpack.c.l.b16 %v798
    %v807 = vunpack.c.l.b16 %v799
    %v808 = vpack.c.b16 %v805, %v804
    %v809 = vpack.c.b16 %v807, %v806
    %v813 = vsel %vm382, %v795, 0
    %815 = vmatpush.bf16.msra.mxu0 0
    %816 = vmatpush.bf16.msra.mxu0 0
    %817 = vmatpush.bf16.msra.mxu0 0
    %818 = vmatpush.bf16.msra.mxu0 0
    %819 = vmatpush.bf16.msra.mxu0 0
    %820 = vmatpush.bf16.msra.mxu0 0
    %821 = vmatpush.bf16.msra.mxu0 %v809
    %822 = vmatpush.bf16.msra.mxu0 %v808
    %823 = vmatmul.bf16.gmra.mxu0 %v813
    %v824 = vpop.f32.mrf.mxu0
    %v825 = vadd.f32 0.0, %v824
    %v826 = vpop.f32.mrf.mxu0
    %v827 = vadd.f32 0.0, %v826
    %828 = vdwg.mxu0
    %v829 = vadd.f32 %v679, %v825
    %v830 = vadd.f32 %v681, %v827
    %831 = vrot.lane.b32.xlu0 %v492, 32
    %v832 = vpop.permute.xlu0 %831
    %833 = vrot.lane.b32.xlu0 %v497, 32
    %v834 = vpop.permute.xlu0 %833
    %v836 = vsel %vm382, %v832, 0
    %v839 = vsel %vm382, %v834, 0
    %841 = vmatpush.bf16.xpose.msra.mxu0 0
    %842 = vmatpush.bf16.xpose.msra.mxu0 0
    %843 = vmatpush.bf16.xpose.msra.mxu0 0
    %844 = vmatpush.bf16.xpose.msra.mxu0 0
    %845 = vmatpush.bf16.xpose.msra.mxu0 0
    %846 = vmatpush.bf16.xpose.msra.mxu0 0
    %847 = vmatpush.bf16.xpose.msra.mxu0 0
    %848 = vmatpush.bf16.xpose.msra.mxu0 %v839
    %849 = vmatmul.bf16.gmra.mxu0 %v836
    %v850 = vpop.f32.mrf.mxu0
    %v851 = vadd.f32 0.0, %v850
    %v852 = vpop.f32.mrf.mxu0
    %853 = vdwg.mxu0
    %854 = vrot.lane.b32.xlu0 %v521, 32
    %v855 = vpop.permute.xlu0 %854
    %856 = vrot.lane.b32.xlu0 %v526, 32
    %v857 = vpop.permute.xlu0 %856
    %v859 = vsel %vm382, %v855, 0
    %v862 = vsel %vm382, %v857, 0
    %864 = vmatpush.bf16.xpose.msra.mxu0 0
    %865 = vmatpush.bf16.xpose.msra.mxu0 0
    %866 = vmatpush.bf16.xpose.msra.mxu0 0
    %867 = vmatpush.bf16.xpose.msra.mxu0 0
    %868 = vmatpush.bf16.xpose.msra.mxu0 0
    %869 = vmatpush.bf16.xpose.msra.mxu0 0
    %870 = vmatpush.bf16.xpose.msra.mxu0 0
    %871 = vmatpush.bf16.xpose.msra.mxu0 %v862
    %872 = vmatmul.bf16.gmra.mxu0 %v859
    %v873 = vpop.f32.mrf.mxu0
    %v874 = vadd.f32 0.0, %v873
    %v875 = vpop.f32.mrf.mxu0
    %876 = vdwg.mxu0
    %v877 = vsel %vm421, %v851, -inf
    %878 = vmax.xlane.f32.xlu0 %v877
    %v879 = vpop.xlane.xlu0 %878
    %v880 = vsel %vm421, %v874, -inf
    %881 = vmax.xlane.f32.xlu0 %v880
    %v882 = vpop.xlane.xlu0 %881
    %v883 = vsub.f32 %v851, %v879
    %v884 = vsub.f32 %v874, %v882
    %v885 = vmul.f32 %v883, 1.442695
    %v886 = vpow.pop %v885
    %v887 = vmul.f32 %v884, 1.442695
    %v888 = vpow.pop %v887
    %v889 = vsel %vm421, %v886, 0.0
    %890 = vadd.xlane.f32.xlu0 %v889
    %v891 = vpop.xlane.xlu0 %890
    %v892 = vsel %vm421, %v888, 0.0
    %893 = vadd.xlane.f32.xlu0 %v892
    %v894 = vpop.xlane.xlu0 %893
    %v895 = vrcp.pop %v891
    %v896 = vrcp.pop %v894
    %v897 = vmul.f32 %v886, %v895
    %v898 = vmul.f32 %v888, %v896
    %v899 = vpack.c.bf16 %v897, %v897
    %v900 = vpack.c.bf16 %v898, %v898
    %901 = vrot.lane.b32.xlu0 %v574, 32
    %v902 = vpop.permute.xlu0 %901
    %v904 = vsel %vm421, %v899, 0
    %v907 = vsel %vm449, %v902, 0
    %909 = vmatpush.bf16.msra.mxu0 0
    %910 = vmatpush.bf16.msra.mxu0 0
    %911 = vmatpush.bf16.msra.mxu0 0
    %912 = vmatpush.bf16.msra.mxu0 0
    %913 = vmatpush.bf16.msra.mxu0 0
    %914 = vmatpush.bf16.msra.mxu0 0
    %915 = vmatpush.bf16.msra.mxu0 0
    %916 = vmatpush.bf16.msra.mxu0 %v907
    %917 = vmatmul.bf16.gmra.mxu0 %v904
    %v918 = vpop.f32.mrf.mxu0
    %v919 = vadd.f32 0.0, %v918
    %v920 = vpop.f32.mrf.mxu0
    %921 = vdwg.mxu0
    %922 = vrot.lane.b32.xlu0 %v598, 32
    %v923 = vpop.permute.xlu0 %922
    %v925 = vsel %vm421, %v900, 0
    %v928 = vsel %vm449, %v923, 0
    %930 = vmatpush.bf16.msra.mxu0 0
    %931 = vmatpush.bf16.msra.mxu0 0
    %932 = vmatpush.bf16.msra.mxu0 0
    %933 = vmatpush.bf16.msra.mxu0 0
    %934 = vmatpush.bf16.msra.mxu0 0
    %935 = vmatpush.bf16.msra.mxu0 0
    %936 = vmatpush.bf16.msra.mxu0 0
    %937 = vmatpush.bf16.msra.mxu0 %v928
    %938 = vmatmul.bf16.gmra.mxu0 %v925
    %v939 = vpop.f32.mrf.mxu0
    %v940 = vadd.f32 0.0, %v939
    %v941 = vpop.f32.mrf.mxu0
    %942 = vdwg.mxu0
    %v943 = vpack.c.bf16 %v940, %v919
    %v944 = vld [vmem:[#allocation10 + $0x30] sm:$0xf]
    %v945 = vld [vmem:[#allocation10 + $0x34] sm:$0xf]
    %v946 = vld [vmem:[#allocation10 + $0x38] sm:$0xf]
    %v947 = vld [vmem:[#allocation10 + $0x3c] sm:$0xf]
    %v952 = vunpack.c.l.b16 %v944
    %v953 = vunpack.c.l.b16 %v945
    %v954 = vunpack.c.l.b16 %v946
    %v955 = vunpack.c.l.b16 %v947
    %v956 = vpack.c.b16 %v953, %v952
    %v957 = vpack.c.b16 %v955, %v954
    %v961 = vsel %vm382, %v943, 0
    %963 = vmatpush.bf16.msra.mxu0 0
    %964 = vmatpush.bf16.msra.mxu0 0
    %965 = vmatpush.bf16.msra.mxu0 0
    %966 = vmatpush.bf16.msra.mxu0 0
    %967 = vmatpush.bf16.msra.mxu0 0
    %968 = vmatpush.bf16.msra.mxu0 0
    %969 = vmatpush.bf16.msra.mxu0 %v957
    %970 = vmatpush.bf16.msra.mxu0 %v956
    %971 = vmatmul.bf16.gmra.mxu0 %v961
    %v972 = vpop.f32.mrf.mxu0
    %v973 = vadd.f32 0.0, %v972
    %v974 = vpop.f32.mrf.mxu0
    %v975 = vadd.f32 0.0, %v974
    %976 = vdwg.mxu0
    %v977 = vadd.f32 %v829, %v973
    %v978 = vadd.f32 %v830, %v975
    %v979 = vld [vmem:[%s6] sm:$0x1]
    %v981 = vperm.slane %v979, 0
    %v983 = vadd.f32 %v977, %v981
    %v984 = vadd.f32 %v978, %v981
    %985 = vst [vmem:[#allocation11] sm:$0xff] %v983
    %986 = vst [vmem:[#allocation11 + $0x8] sm:$0xff] %v984
    // Predicated region
    $region50: #{tpu_custom_call.1} parent=1 // pred_check
      _
    $region51: #{tpu_custom_call.1} parent=1 // pred_check_branch
      %988 = sbr.rel (0) target = $region53
    $region52: #{tpu_custom_call.1} parent=1 // pred_region
      %990 = vsyncadd [#allocation4], 0
      %s991 = sshll.u32 [#allocation11], 4
      %s992 = int_to_ptr.vmem [resolvable:$true] %s991
      %s993 = sshll.u32 %s7, 4
      %s994 = int_to_ptr.hbm [resolvable:$true] %s993
      %999 = dma.vmem_to_hbm [thread:$0]  %s992, 256, %s994, [#allocation4], 128, 128, 8
    $region53: #{tpu_custom_call.1} parent=1 // pred_fallthru
      _
    // Predicated region
    $region54: #{tpu_custom_call.1} parent=1 // pred_check
      _
    $region55: #{tpu_custom_call.1} parent=1 // pred_check_branch
      %1001 = sbr.rel (0) target = $region57
    $region56: #{tpu_custom_call.1} parent=1 // pred_region
      %1003 = dma.done [#allocation4], 256
    $region57: #{tpu_custom_call.1} parent=1 // pred_fallthru
      _
    %1004 = vsyncpa [#allocation3], 1
    %1005 = vsyncpa [#allocation6], 1
    %1006 = vsyncpa [#allocation9], 1
    %1007 = vsyncpa [#allocation4], 1

</llo_original>
